<compile_context>
chip_gen: v7x
topology: tpu7x:2x2x1
jax: 0.10.0
libtpu: 0.0.40
codegen_flags: <defaults>
</compile_context>

<pallas_src>
import jax
import jax.numpy as jnp
from jax.experimental import pallas as pl
from jax.experimental.pallas import tpu as pltpu

INPUT_DIM = 64
HIDDEN1 = 256
HIDDEN2 = 512
HIDDEN3 = 256
OUTPUT_DIM = 32
BN_EPS = 1e-5

OUT_PAD = 128       # pad output features 32 -> 128 lanes (lane-dense stores)
TILE_B_MAX = 512    # max batch tile (multiple of 256); VMEM stays << limits


def _round_up(n, m):
    return ((n + m - 1) // m) * m


def _choose_tile_b(batch):
    """Small batches: one minimal tile (latency). Large: big tiles, >=2 blocks."""
    padded = _round_up(batch, 16)          # 16-row multiple (bf16 sublane packing)
    if padded <= 256:
        return padded                      # latency path: no wasted pad rows
    # throughput path: amortize per-step overhead, but keep n_blocks >= 2 so the
    # parallel batch axis can shard across both v7x TensorCores.
    half = _round_up(pl.cdiv(padded, 2), 256)
    return min(TILE_B_MAX, half)


def simplenn_kernel(
    x_ref,
    w1_ref, b1_ref,
    w2_ref, b2_ref,
    w3_ref, b3_ref,
    w4_ref, b4_ref,
    out_ref,
):
    # fc1 (+ folded bn1) -> relu   (dropout1 is identity in eval)
    h = jnp.dot(x_ref[...], w1_ref[...],
                preferred_element_type=jnp.float32) + b1_ref[...]
    h = jnp.maximum(h, 0.0)

    # fc2 (+ folded bn2) -> relu
    h = jnp.dot(h.astype(jnp.bfloat16), w2_ref[...],
                preferred_element_type=jnp.float32) + b2_ref[...]
    h = jnp.maximum(h, 0.0)

    # fc3 (+ folded bn3) -> relu
    h = jnp.dot(h.astype(jnp.bfloat16), w3_ref[...],
                preferred_element_type=jnp.float32) + b3_ref[...]
    h = jnp.maximum(h, 0.0)

    # fc4 (output columns [32:128] are zero-padded weights -> zeros)
    out = jnp.dot(h.astype(jnp.bfloat16), w4_ref[...],
                  preferred_element_type=jnp.float32) + b4_ref[...]
    out_ref[...] = out.astype(out_ref.dtype)


def make_params(key):
    """Init mirroring nn.Linear defaults; BN (eval) folded; weights bf16."""
    dims = [(INPUT_DIM, HIDDEN1), (HIDDEN1, HIDDEN2),
            (HIDDEN2, HIDDEN3), (HIDDEN3, OUTPUT_DIM)]
    raw = {}
    for i, (fan_in, fan_out) in enumerate(dims, start=1):
        key, kw, kb = jax.random.split(key, 3)
        bound = float(fan_in) ** -0.5
        # Stored as (in, out) so the kernel does x @ W (math identical to PyTorch's (out, in)).
        raw[f"w{i}"] = jax.random.uniform(kw, (fan_in, fan_out), jnp.float32, -bound, bound)
        raw[f"b{i}"] = jax.random.uniform(kb, (1, fan_out), jnp.float32, -bound, bound)

    # BatchNorm1d eval-mode defaults (gamma=1, beta=0, mean=0, var=1) folded into W/b:
    #   scale = gamma / sqrt(var + eps); shift = beta - mean * scale
    #   W' = W * scale (per output column); b' = b * scale + shift
    # TODO(synk): for a trained checkpoint, fold the real running_mean/var here.
    folded = {}
    for i in (1, 2, 3):
        feat = raw[f"w{i}"].shape[1]
        gamma = jnp.ones((1, feat), jnp.float32)
        beta = jnp.zeros((1, feat), jnp.float32)
        mean = jnp.zeros((1, feat), jnp.float32)
        var = jnp.ones((1, feat), jnp.float32)
        scale = gamma / jnp.sqrt(var + BN_EPS)
        shift = beta - mean * scale
        folded[f"w{i}"] = raw[f"w{i}"] * scale
        folded[f"b{i}"] = raw[f"b{i}"] * scale + shift
    folded["w4"] = raw["w4"]
    folded["b4"] = raw["b4"]

    # Pad only the output layer to 128 lanes (zero columns -> numerically identical).
    w4 = jnp.zeros((HIDDEN3, OUT_PAD), jnp.float32).at[:, :OUTPUT_DIM].set(folded["w4"])
    b4 = jnp.zeros((1, OUT_PAD), jnp.float32).at[:, :OUTPUT_DIM].set(folded["b4"])

    return {
        "w1": folded["w1"].astype(jnp.bfloat16), "b1": folded["b1"],
        "w2": folded["w2"].astype(jnp.bfloat16), "b2": folded["b2"],
        "w3": folded["w3"].astype(jnp.bfloat16), "b3": folded["b3"],
        "w4": w4.astype(jnp.bfloat16), "b4": b4,
    }


def simplenn_forward(x, params):
    batch = x.shape[0]
    tile_b = _choose_tile_b(batch)
    n_blocks = pl.cdiv(batch, tile_b)
    padded_b = n_blocks * tile_b

    # bf16 input; pad rows only if the batch doesn't fill the last tile.
    x_in = x.astype(jnp.bfloat16)
    if padded_b != batch:
        x_in = jnp.zeros((padded_b, INPUT_DIM), jnp.bfloat16).at[:batch, :].set(x_in)

    args = (
        x_in,
        params["w1"], params["b1"],
        params["w2"], params["b2"],
        params["w3"], params["b3"],
        params["w4"], params["b4"],
    )

    # x/out tiled on the batch axis; params use a constant index_map so they stay
    # resident in VMEM across grid steps.
    in_specs = [pl.BlockSpec((tile_b, INPUT_DIM), lambda i: (i, 0))]
    in_specs += [pl.BlockSpec(a.shape, lambda i: (0, 0)) for a in args[1:]]
    out_specs = pl.BlockSpec((tile_b, OUT_PAD), lambda i: (i, 0))

    flops = 2 * padded_b * (INPUT_DIM * HIDDEN1 + HIDDEN1 * HIDDEN2
                            + HIDDEN2 * HIDDEN3 + HIDDEN3 * OUT_PAD)
    bytes_accessed = (int(x_in.size) * 2
                      + sum(int(a.size) * a.dtype.itemsize for a in args[1:])
                      + padded_b * OUT_PAD * 2)

    out_pad = pl.pallas_call(
        simplenn_kernel,
        out_shape=jax.ShapeDtypeStruct((padded_b, OUT_PAD), jnp.bfloat16),
        grid=(n_blocks,),
        in_specs=in_specs,
        out_specs=out_specs,
        compiler_params=pltpu.CompilerParams(
            dimension_semantics=("parallel",),       # batch axis -> megacore on v7x
            vmem_limit_bytes=32 * 1024 * 1024,       # weights ~0.6 MiB bf16 + tiles, huge margin
        ),
        cost_estimate=pl.CostEstimate(
            flops=flops, transcendentals=0, bytes_accessed=bytes_accessed),
    )(*args)

    # Consumers that tolerate the padded bf16 (padded_b, 128) buffer can use
    # out_pad directly and skip this compaction pass.
    return out_pad[:batch, :OUTPUT_DIM].astype(jnp.float32)


def reference_forward(x, params):
    """Pure-JAX reference mirroring the kernel's bf16-input / f32-accum math."""
    h = x.astype(jnp.bfloat16)
    for i in (1, 2, 3):
        h = jnp.dot(h, params[f"w{i}"],
                    preferred_element_type=jnp.float32) + params[f"b{i}"]
        h = jnp.maximum(h, 0.0).astype(jnp.bfloat16)
    out = jnp.dot(h, params["w4"],
                  preferred_element_type=jnp.float32) + params["b4"]
    out = out.astype(jnp.bfloat16)           # match the kernel's bf16 writeback
    return out[:, :OUTPUT_DIM].astype(jnp.float32)


if __name__ == "__main__":
    key = jax.random.PRNGKey(0)
    key, kx = jax.random.split(key)
    batch = 8
    x = jax.random.normal(kx, (batch, INPUT_DIM), jnp.float32)
    params = make_params(key)

    out = simplenn_forward(x, params)
    out = jax.block_until_ready(out)

    ref = reference_forward(x, params)
    assert out.shape == (batch, OUTPUT_DIM)
    assert jnp.allclose(out, ref, atol=2e-2, rtol=2e-2), "mismatch vs reference"

    print("KERNEL_OK")
</pallas_src>

<mosaic_0001>
module attributes {stable_mosaic.version = 11 : i64} {
  func.func @simplenn_kernel(%arg0: i32, %arg1: memref<16x64xbf16, #tpu.memory_space<vmem>>, %arg2: memref<64x256xbf16, #tpu.memory_space<vmem>>, %arg3: memref<1x256xf32, #tpu.memory_space<vmem>>, %arg4: memref<256x512xbf16, #tpu.memory_space<vmem>>, %arg5: memref<1x512xf32, #tpu.memory_space<vmem>>, %arg6: memref<512x256xbf16, #tpu.memory_space<vmem>>, %arg7: memref<1x256xf32, #tpu.memory_space<vmem>>, %arg8: memref<256x128xbf16, #tpu.memory_space<vmem>>, %arg9: memref<1x128xf32, #tpu.memory_space<vmem>>, %arg10: memref<16x128xbf16, #tpu.memory_space<vmem>>) attributes {dimension_semantics = [#tpu.dimension_semantics<parallel>], iteration_bounds = array<i64: 1>, scalar_prefetch = 0 : i64, scratch_operands = 0 : i64, tpu.core_type = #tpu.core_type<tc>, window_params = [{transform_indices = @transform_0, window_bounds = array<i64: 16, 64>}, {pipeline_mode = #tpu.pipeline_mode<synchronous>, transform_indices = @transform_1, window_bounds = array<i64: 64, 256>}, {pipeline_mode = #tpu.pipeline_mode<synchronous>, transform_indices = @transform_2, window_bounds = array<i64: 1, 256>}, {pipeline_mode = #tpu.pipeline_mode<synchronous>, transform_indices = @transform_3, window_bounds = array<i64: 256, 512>}, {pipeline_mode = #tpu.pipeline_mode<synchronous>, transform_indices = @transform_4, window_bounds = array<i64: 1, 512>}, {pipeline_mode = #tpu.pipeline_mode<synchronous>, transform_indices = @transform_5, window_bounds = array<i64: 512, 256>}, {pipeline_mode = #tpu.pipeline_mode<synchronous>, transform_indices = @transform_6, window_bounds = array<i64: 1, 256>}, {pipeline_mode = #tpu.pipeline_mode<synchronous>, transform_indices = @transform_7, window_bounds = array<i64: 256, 128>}, {pipeline_mode = #tpu.pipeline_mode<synchronous>, transform_indices = @transform_8, window_bounds = array<i64: 1, 128>}, {transform_indices = @transform_9, window_bounds = array<i64: 16, 128>}]} {
    %c0 = arith.constant 0 : index
    %c0_0 = arith.constant 0 : index
    %0 = vector.load %arg1[%c0, %c0_0] : memref<16x64xbf16, #tpu.memory_space<vmem>>, vector<16x64xbf16>
    %c0_1 = arith.constant 0 : index
    %c0_2 = arith.constant 0 : index
    %1 = vector.load %arg2[%c0_1, %c0_2] : memref<64x256xbf16, #tpu.memory_space<vmem>>, vector<64x256xbf16>
    %cst = arith.constant dense<0.000000e+00> : vector<16x256xf32>
    %2 = tpu.matmul %0, %1, %cst {dimension_numbers = #tpu.dot_dimension_numbers<[1], [0], [0], [1], [0, 0, 1, 1], [], []>} : vector<16x64xbf16>, vector<64x256xbf16>, vector<16x256xf32> -> vector<16x256xf32>
    %c0_3 = arith.constant 0 : index
    %c0_4 = arith.constant 0 : index
    %3 = vector.load %arg3[%c0_3, %c0_4] : memref<1x256xf32, #tpu.memory_space<vmem>>, vector<1x256xf32>
    %4 = vector.broadcast %3 : vector<1x256xf32> to vector<16x256xf32>
    %5 = arith.addf %2, %4 : vector<16x256xf32>
    %cst_5 = arith.constant 0.000000e+00 : f32
    %6 = vector.broadcast %cst_5 : f32 to vector<16x256xf32>
    %7 = arith.maximumf %5, %6 : vector<16x256xf32>
    %8 = arith.truncf %7 : vector<16x256xf32> to vector<16x256xbf16>
    %c0_6 = arith.constant 0 : index
    %c0_7 = arith.constant 0 : index
    %9 = vector.load %arg4[%c0_6, %c0_7] : memref<256x512xbf16, #tpu.memory_space<vmem>>, vector<256x512xbf16>
    %cst_8 = arith.constant dense<0.000000e+00> : vector<16x512xf32>
    %10 = tpu.matmul %8, %9, %cst_8 {dimension_numbers = #tpu.dot_dimension_numbers<[1], [0], [0], [1], [0, 0, 1, 1], [], []>} : vector<16x256xbf16>, vector<256x512xbf16>, vector<16x512xf32> -> vector<16x512xf32>
    %c0_9 = arith.constant 0 : index
    %c0_10 = arith.constant 0 : index
    %11 = vector.load %arg5[%c0_9, %c0_10] : memref<1x512xf32, #tpu.memory_space<vmem>>, vector<1x512xf32>
    %12 = vector.broadcast %11 : vector<1x512xf32> to vector<16x512xf32>
    %13 = arith.addf %10, %12 : vector<16x512xf32>
    %cst_11 = arith.constant 0.000000e+00 : f32
    %14 = vector.broadcast %cst_11 : f32 to vector<16x512xf32>
    %15 = arith.maximumf %13, %14 : vector<16x512xf32>
    %16 = arith.truncf %15 : vector<16x512xf32> to vector<16x512xbf16>
    %c0_12 = arith.constant 0 : index
    %c0_13 = arith.constant 0 : index
    %17 = vector.load %arg6[%c0_12, %c0_13] : memref<512x256xbf16, #tpu.memory_space<vmem>>, vector<512x256xbf16>
    %cst_14 = arith.constant dense<0.000000e+00> : vector<16x256xf32>
    %18 = tpu.matmul %16, %17, %cst_14 {dimension_numbers = #tpu.dot_dimension_numbers<[1], [0], [0], [1], [0, 0, 1, 1], [], []>} : vector<16x512xbf16>, vector<512x256xbf16>, vector<16x256xf32> -> vector<16x256xf32>
    %c0_15 = arith.constant 0 : index
    %c0_16 = arith.constant 0 : index
    %19 = vector.load %arg7[%c0_15, %c0_16] : memref<1x256xf32, #tpu.memory_space<vmem>>, vector<1x256xf32>
    %20 = vector.broadcast %19 : vector<1x256xf32> to vector<16x256xf32>
    %21 = arith.addf %18, %20 : vector<16x256xf32>
    %cst_17 = arith.constant 0.000000e+00 : f32
    %22 = vector.broadcast %cst_17 : f32 to vector<16x256xf32>
    %23 = arith.maximumf %21, %22 : vector<16x256xf32>
    %24 = arith.truncf %23 : vector<16x256xf32> to vector<16x256xbf16>
    %c0_18 = arith.constant 0 : index
    %c0_19 = arith.constant 0 : index
    %25 = vector.load %arg8[%c0_18, %c0_19] : memref<256x128xbf16, #tpu.memory_space<vmem>>, vector<256x128xbf16>
    %cst_20 = arith.constant dense<0.000000e+00> : vector<16x128xf32>
    %26 = tpu.matmul %24, %25, %cst_20 {dimension_numbers = #tpu.dot_dimension_numbers<[1], [0], [0], [1], [0, 0, 1, 1], [], []>} : vector<16x256xbf16>, vector<256x128xbf16>, vector<16x128xf32> -> vector<16x128xf32>
    %c0_21 = arith.constant 0 : index
    %c0_22 = arith.constant 0 : index
    %27 = vector.load %arg9[%c0_21, %c0_22] : memref<1x128xf32, #tpu.memory_space<vmem>>, vector<1x128xf32>
    %28 = vector.broadcast %27 : vector<1x128xf32> to vector<16x128xf32>
    %29 = arith.addf %26, %28 : vector<16x128xf32>
    %30 = arith.truncf %29 : vector<16x128xf32> to vector<16x128xbf16>
    %c0_23 = arith.constant 0 : index
    %c0_24 = arith.constant 0 : index
    %31 = vector.load %arg10[%c0_23, %c0_24] : memref<16x128xbf16, #tpu.memory_space<vmem>>, vector<16x128xbf16>
    tpu.vector_store %arg10[%c0_23, %c0_24], %30 {strides = array<i32>} : memref<16x128xbf16, #tpu.memory_space<vmem>>, vector<16x128xbf16>,
    return
  }
  func.func @transform_0(%arg0: i32) -> (i32, i32) {
    %c0_i32 = arith.constant 0 : i32
    %c0_i32_0 = arith.constant 0 : i32
    return %arg0, %c0_i32 : i32, i32
  }
  func.func @transform_1(%arg0: i32) -> (i32, i32) {
    %c0_i32 = arith.constant 0 : i32
    %c0_i32_0 = arith.constant 0 : i32
    %c0_i32_1 = arith.constant 0 : i32
    return %c0_i32, %c0_i32_0 : i32, i32
  }
  func.func @transform_2(%arg0: i32) -> (i32, i32) {
    %c0_i32 = arith.constant 0 : i32
    %c0_i32_0 = arith.constant 0 : i32
    %c0_i32_1 = arith.constant 0 : i32
    return %c0_i32, %c0_i32_0 : i32, i32
  }
  func.func @transform_3(%arg0: i32) -> (i32, i32) {
    %c0_i32 = arith.constant 0 : i32
    %c0_i32_0 = arith.constant 0 : i32
    %c0_i32_1 = arith.constant 0 : i32
    return %c0_i32, %c0_i32_0 : i32, i32
  }
  func.func @transform_4(%arg0: i32) -> (i32, i32) {
    %c0_i32 = arith.constant 0 : i32
    %c0_i32_0 = arith.constant 0 : i32
    %c0_i32_1 = arith.constant 0 : i32
    return %c0_i32, %c0_i32_0 : i32, i32
  }
  func.func @transform_5(%arg0: i32) -> (i32, i32) {
    %c0_i32 = arith.constant 0 : i32
    %c0_i32_0 = arith.constant 0 : i32
    %c0_i32_1 = arith.constant 0 : i32
    return %c0_i32, %c0_i32_0 : i32, i32
  }
  func.func @transform_6(%arg0: i32) -> (i32, i32) {
    %c0_i32 = arith.constant 0 : i32
    %c0_i32_0 = arith.constant 0 : i32
    %c0_i32_1 = arith.constant 0 : i32
    return %c0_i32, %c0_i32_0 : i32, i32
  }
  func.func @transform_7(%arg0: i32) -> (i32, i32) {
    %c0_i32 = arith.constant 0 : i32
    %c0_i32_0 = arith.constant 0 : i32
    %c0_i32_1 = arith.constant 0 : i32
    return %c0_i32, %c0_i32_0 : i32, i32
  }
  func.func @transform_8(%arg0: i32) -> (i32, i32) {
    %c0_i32 = arith.constant 0 : i32
    %c0_i32_0 = arith.constant 0 : i32
    %c0_i32_1 = arith.constant 0 : i32
    return %c0_i32, %c0_i32_0 : i32, i32
  }
  func.func @transform_9(%arg0: i32) -> (i32, i32) {
    %c0_i32 = arith.constant 0 : i32
    %c0_i32_0 = arith.constant 0 : i32
    return %arg0, %c0_i32 : i32, i32
  }
}

</mosaic_0001>

<llo_original>
// kernel: tpu_custom_call.1
$region0: #{tpu_custom_call.1}
  #allocation0 [shape = 'u32[]', space=smem, size = 0x4, offset = 0x4, fixed_abs, tag = 'smem constant byte address 0x4 - core index']
  #allocation1 [shape = 'u32[144,128]{1,0:T(1,128)}', space=vmem, size = 0x12000, scoped, tag = 'internal scratch']
  %s0 = inlined_call_operand.hbm [shape: bf16[16,64], index: 0, kind: input, shape index: {}]
  %s1 = inlined_call_operand.hbm [shape: bf16[64,256], index: 1, kind: input, shape index: {}]
  %s2 = inlined_call_operand.vmem [shape: f32[1,256], index: 2, kind: input, shape index: {}]
  %s3 = inlined_call_operand.hbm [shape: bf16[256,512], index: 3, kind: input, shape index: {}]
  %s4 = inlined_call_operand.vmem [shape: f32[1,512], index: 4, kind: input, shape index: {}]
  %s5 = inlined_call_operand.hbm [shape: bf16[512,256], index: 5, kind: input, shape index: {}]
  %s6 = inlined_call_operand.vmem [shape: f32[1,256], index: 6, kind: input, shape index: {}]
  %s7 = inlined_call_operand.hbm [shape: bf16[256,128], index: 7, kind: input, shape index: {}]
  %s8 = inlined_call_operand.vmem [shape: f32[1,128], index: 8, kind: input, shape index: {}]
  %s9 = inlined_call_operand.hbm [shape: bf16[16,128], index: 9, kind: output, shape index: {}]
  %s10 = sld [smem:[#allocation0]]
  $region66: #{tpu_custom_call.1} parent=0
    _
  %s12 = ssub.s32 1, %s10
  %s13 = scalar_select 0, %s12, %s10
  $region1: #{tpu_custom_call.1} parent=0
    #allocation2 [shape = 'u8[4096]{0}', space=vmem, size = 0x1000, scoped, tag = 'input window, operand 0, single buffered']
    #allocation3 [shape = 's32[1]{0}', space=sflag, size = 0x4, scoped, tag = 'scoped memory for tpu_custom_call.1']
    #allocation4 [shape = 's32[1]{0}', space=sflag, size = 0x4, scoped, tag = 'scoped memory for tpu_custom_call.1']
    #allocation5 [shape = 'u8[32768]{0}', space=vmem, size = 0x8000, scoped, tag = 'input window, operand 1, single buffered']
    #allocation6 [shape = 's32[1]{0}', space=sflag, size = 0x4, scoped, tag = 'scoped memory for tpu_custom_call.1']
    #allocation7 [shape = 'u8[262144]{0}', space=vmem, size = 0x40000, scoped, tag = 'input window, operand 3, single buffered']
    #allocation8 [shape = 'u8[262144]{0}', space=vmem, size = 0x40000, scoped, tag = 'input window, operand 5, single buffered']
    #allocation9 [shape = 's32[1]{0}', space=sflag, size = 0x4, scoped, tag = 'scoped memory for tpu_custom_call.1']
    #allocation10 [shape = 'u8[65536]{0}', space=vmem, size = 0x10000, scoped, tag = 'input window, operand 7, single buffered']
    #allocation11 [shape = 'u8[4096]{0}', space=vmem, size = 0x1000, scoped, tag = 'output window, operand 0, single buffered']
    %14 = vsyncpa [#allocation3], 0
    %15 = vsyncpa [#allocation6], 0
    %16 = vsyncpa [#allocation9], 0
    %17 = vsyncpa [#allocation4], 0
    // Predicated region
    $region2: #{tpu_custom_call.1} parent=1 // pred_check
      _
    $region3: #{tpu_custom_call.1} parent=1 // pred_check_branch
      %19 = sbr.rel (0) target = $region5
    $region4: #{tpu_custom_call.1} parent=1 // pred_region
      %s21 = ssub.s32 128, 128
      %22 = vsyncadd [#allocation3], %s21
      %s23 = sshll.u32 [#allocation2], 4
      %s24 = int_to_ptr.vmem [resolvable:$true] %s23
      %29 = dma.hbm_to_vmem [thread:$0]  %s0, 128, %s24, [#allocation3], 64, 64, 4
    $region5: #{tpu_custom_call.1} parent=1 // pred_fallthru
      _
    // Predicated region
    $region6: #{tpu_custom_call.1} parent=1 // pred_check
      _
    $region7: #{tpu_custom_call.1} parent=1 // pred_check_branch
      %31 = sbr.rel (0) target = $region9
    $region8: #{tpu_custom_call.1} parent=1 // pred_region
      %s33 = ssub.s32 1024, 1024
      %34 = vsyncadd [#allocation6], %s33
      %s35 = sshll.u32 [#allocation5], 4
      %s36 = int_to_ptr.vmem [resolvable:$true] %s35
      %41 = dma.hbm_to_vmem [thread:$0]  %s1, 1024, %s36, [#allocation6], 128, 128, 8
    $region9: #{tpu_custom_call.1} parent=1 // pred_fallthru
      _
    // Predicated region
    $region10: #{tpu_custom_call.1} parent=1 // pred_check
      _
    $region11: #{tpu_custom_call.1} parent=1 // pred_check_branch
      %43 = sbr.rel (0) target = $region13
    $region12: #{tpu_custom_call.1} parent=1 // pred_region
      _
    $region13: #{tpu_custom_call.1} parent=1 // pred_fallthru
      _
    // Predicated region
    $region14: #{tpu_custom_call.1} parent=1 // pred_check
      _
    $region15: #{tpu_custom_call.1} parent=1 // pred_check_branch
      %45 = sbr.rel (0) target = $region17
    $region16: #{tpu_custom_call.1} parent=1 // pred_region
      %s47 = ssub.s32 8192, 8192
      %48 = vsyncadd [#allocation6], %s47
      %s49 = sshll.u32 [#allocation7], 4
      %s50 = int_to_ptr.vmem [resolvable:$true] %s49
      %55 = dma.hbm_to_vmem [thread:$0]  %s3, 8192, %s50, [#allocation6], 256, 256, 16
    $region17: #{tpu_custom_call.1} parent=1 // pred_fallthru
      _
    // Predicated region
    $region18: #{tpu_custom_call.1} parent=1 // pred_check
      _
    $region19: #{tpu_custom_call.1} parent=1 // pred_check_branch
      %57 = sbr.rel (0) target = $region21
    $region20: #{tpu_custom_call.1} parent=1 // pred_region
      _
    $region21: #{tpu_custom_call.1} parent=1 // pred_fallthru
      _
    // Predicated region
    $region22: #{tpu_custom_call.1} parent=1 // pred_check
      _
    $region23: #{tpu_custom_call.1} parent=1 // pred_check_branch
      %59 = sbr.rel (0) target = $region25
    $region24: #{tpu_custom_call.1} parent=1 // pred_region
      %s61 = ssub.s32 8192, 8192
      %62 = vsyncadd [#allocation9], %s61
      %s63 = sshll.u32 [#allocation8], 4
      %s64 = int_to_ptr.vmem [resolvable:$true] %s63
      %69 = dma.hbm_to_vmem [thread:$0]  %s5, 8192, %s64, [#allocation9], 128, 128, 8
    $region25: #{tpu_custom_call.1} parent=1 // pred_fallthru
      _
    // Predicated region
    $region26: #{tpu_custom_call.1} parent=1 // pred_check
      _
    $region27: #{tpu_custom_call.1} parent=1 // pred_check_branch
      %71 = sbr.rel (0) target = $region29
    $region28: #{tpu_custom_call.1} parent=1 // pred_region
      _
    $region29: #{tpu_custom_call.1} parent=1 // pred_fallthru
      _
    // Predicated region
    $region30: #{tpu_custom_call.1} parent=1 // pred_check
      _
    $region31: #{tpu_custom_call.1} parent=1 // pred_check_branch
      %73 = sbr.rel (0) target = $region33
    $region32: #{tpu_custom_call.1} parent=1 // pred_region
      %s75 = ssub.s32 2048, 2048
      %76 = vsyncadd [#allocation9], %s75
      %s77 = sshll.u32 [#allocation10], 4
      %s78 = int_to_ptr.vmem [resolvable:$true] %s77
      %83 = dma.hbm_to_vmem [thread:$0]  %s7, 2048, %s78, [#allocation9], 64, 64, 4
    $region33: #{tpu_custom_call.1} parent=1 // pred_fallthru
      _
    // Predicated region
    $region34: #{tpu_custom_call.1} parent=1 // pred_check
      _
    $region35: #{tpu_custom_call.1} parent=1 // pred_check_branch
      %85 = sbr.rel (0) target = $region37
    $region36: #{tpu_custom_call.1} parent=1 // pred_region
      _
    $region37: #{tpu_custom_call.1} parent=1 // pred_fallthru
      _
    // Predicated region
    $region38: #{tpu_custom_call.1} parent=1 // pred_check
      _
    $region39: #{tpu_custom_call.1} parent=1 // pred_check_branch
      %87 = sbr.rel (0) target = $region41
    $region40: #{tpu_custom_call.1} parent=1 // pred_region
      %88 = dma.done [#allocation3], 128
    $region41: #{tpu_custom_call.1} parent=1 // pred_fallthru
      _
    // Predicated region
    $region42: #{tpu_custom_call.1} parent=1 // pred_check
      _
    $region43: #{tpu_custom_call.1} parent=1 // pred_check_branch
      %90 = sbr.rel (0) target = $region45
    $region44: #{tpu_custom_call.1} parent=1 // pred_region
      %91 = dma.done [#allocation6], 1024
    $region45: #{tpu_custom_call.1} parent=1 // pred_fallthru
      _
    // Predicated region
    $region46: #{tpu_custom_call.1} parent=1 // pred_check
      _
    $region47: #{tpu_custom_call.1} parent=1 // pred_check_branch
      %93 = sbr.rel (0) target = $region49
    $region48: #{tpu_custom_call.1} parent=1 // pred_region
      %94 = dma.done [#allocation6], 8192
    $region49: #{tpu_custom_call.1} parent=1 // pred_fallthru
      _
    // Predicated region
    $region50: #{tpu_custom_call.1} parent=1 // pred_check
      _
    $region51: #{tpu_custom_call.1} parent=1 // pred_check_branch
      %96 = sbr.rel (0) target = $region53
    $region52: #{tpu_custom_call.1} parent=1 // pred_region
      %97 = dma.done [#allocation9], 8192
    $region53: #{tpu_custom_call.1} parent=1 // pred_fallthru
      _
    // Predicated region
    $region54: #{tpu_custom_call.1} parent=1 // pred_check
      _
    $region55: #{tpu_custom_call.1} parent=1 // pred_check_branch
      %99 = sbr.rel (0) target = $region57
    $region56: #{tpu_custom_call.1} parent=1 // pred_region
      %100 = dma.done [#allocation9], 2048
    $region57: #{tpu_custom_call.1} parent=1 // pred_fallthru
      _
    %v102 = vld [vmem:[#allocation2] sm:$0xf]
    %v103 = vld [vmem:[#allocation2 + $0x4] sm:$0xf]
    %v104 = vld [vmem:[#allocation5] sm:$0xff]
    %v105 = vld [vmem:[#allocation5 + $0x8] sm:$0xff]
    %v106 = vld [vmem:[#allocation5 + $0x10] sm:$0xff]
    %v107 = vld [vmem:[#allocation5 + $0x18] sm:$0xff]
    %v108 = vld [vmem:[#allocation5 + $0x20] sm:$0xff]
    %v109 = vld [vmem:[#allocation5 + $0x28] sm:$0xff]
    %v110 = vld [vmem:[#allocation5 + $0x30] sm:$0xff]
    %v111 = vld [vmem:[#allocation5 + $0x38] sm:$0xff]
    %v112 = vld [vmem:[%s2] sm:$0x3]
    %v114 = vlaneseq
    %v115 = vshrl.u32 %v114, 7
    %v116 = vsub.s32 0, %v115
    %v117 = vrot.slane %v112, %v116
    %v118 = vlaneseq
    %v119 = vshrl.u32 %v118, 7
    %v120 = vsub.s32 1, %v119
    %v121 = vrot.slane %v112, %v120
    %v126 = vunpack.c.l.b16 %v102
    %v127 = vunpack.c.l.b16 %v103
    %v128 = vpack.c.b16 %v127, %v126
    %v137 = vunpack.c.l.b16 %v104
    %v138 = vunpack.c.h.b16 %v104
    %v139 = vunpack.c.l.b16 %v105
    %v140 = vunpack.c.h.b16 %v105
    %v141 = vunpack.c.l.b16 %v106
    %v142 = vunpack.c.h.b16 %v106
    %v143 = vunpack.c.l.b16 %v107
    %v144 = vunpack.c.h.b16 %v107
    %v145 = vunpack.c.l.b16 %v108
    %v146 = vunpack.c.h.b16 %v108
    %v147 = vunpack.c.l.b16 %v109
    %v148 = vunpack.c.h.b16 %v109
    %v149 = vunpack.c.l.b16 %v110
    %v150 = vunpack.c.h.b16 %v110
    %v151 = vunpack.c.l.b16 %v111
    %v152 = vunpack.c.h.b16 %v111
    %v153 = vpack.c.b16 %v139, %v137
    %v154 = vpack.c.b16 %v140, %v138
    %v155 = vpack.c.b16 %v143, %v141
    %v156 = vpack.c.b16 %v144, %v142
    %v157 = vpack.c.b16 %v147, %v145
    %v158 = vpack.c.b16 %v148, %v146
    %v159 = vpack.c.b16 %v151, %v149
    %v160 = vpack.c.b16 %v152, %v150
    %vm169 = vcmask 523264
    %v171 = vsel %vm169, %v128, 0
    %173 = vmatprep.subr.bf16.mxu0 %v154
    %174 = vmatpush1.bf16.msra.mxu0 %v153
    %175 = vmatprep.subr.bf16.mxu0 %v156
    %176 = vmatpush1.bf16.msra.mxu0 %v155
    %177 = vmatprep.subr.bf16.mxu0 %v158
    %178 = vmatpush1.bf16.msra.mxu0 %v157
    %179 = vmatprep.subr.bf16.mxu0 %v160
    %180 = vmatpush1.bf16.msra.mxu0 %v159
    %181 = vmatprep.subr.bf16.mxu0 0
    %182 = vmatpush1.bf16.msra.mxu0 0
    %183 = vmatprep.subr.bf16.mxu0 0
    %184 = vmatpush1.bf16.msra.mxu0 0
    %185 = vmatprep.subr.bf16.mxu0 0
    %186 = vmatpush1.bf16.msra.mxu0 0
    %187 = vmatprep.subr.bf16.mxu0 0
    %188 = vmatpush1.bf16.msra.mxu0 0
    %189 = vmatprep.subr.bf16.mxu0 0
    %190 = vmatpush1.bf16.msra.mxu0 0
    %191 = vmatprep.subr.bf16.mxu0 0
    %192 = vmatpush1.bf16.msra.mxu0 0
    %193 = vmatprep.subr.bf16.mxu0 0
    %194 = vmatpush1.bf16.msra.mxu0 0
    %195 = vmatprep.subr.bf16.mxu0 0
    %196 = vmatpush1.bf16.msra.mxu0 0
    %197 = vmatprep.subr.bf16.mxu0 0
    %198 = vmatpush1.bf16.msra.mxu0 0
    %199 = vmatprep.subr.bf16.mxu0 0
    %200 = vmatpush1.bf16.msra.mxu0 0
    %201 = vmatprep.subr.bf16.mxu0 0
    %202 = vmatpush1.bf16.msra.mxu0 0
    %203 = vmatprep.subr.bf16.mxu0 0
    %204 = vmatpush1.bf16.msra.mxu0 0
    %205 = vmatprep.mubr.bf16.mxu0 0
    %206 = vmatmul.mubr.bf16.gmra.mrb[0].mxu0 %v171
    %v207 = vpop.f32.mrb[0].mxu0
    %v208 = vadd.f32 %v117, %v207
    %v209 = vpop.f32.mrb[0].mxu0
    %v210 = vadd.f32 %v121, %v209
    %v211 = vpop.f32.mrb[0].mxu0
    %v212 = vadd.f32 %v117, %v211
    %v213 = vpop.f32.mrb[0].mxu0
    %v214 = vadd.f32 %v121, %v213
    %215 = vdwg.mxu0
    %v216 = vmax.f32 %v208, 0.0
    %v217 = vmax.f32 %v210, 0.0
    %v218 = vmax.f32 %v212, 0.0
    %v219 = vmax.f32 %v214, 0.0
    %v220 = vpack.c.bf16 %v218, %v216
    %v221 = vpack.c.bf16 %v219, %v217
    %v222 = vld [vmem:[#allocation7] sm:$0xff]
    %v223 = vld [vmem:[#allocation7 + $0x8] sm:$0xff]
    %v224 = vld [vmem:[#allocation7 + $0x10] sm:$0xff]
    %v225 = vld [vmem:[#allocation7 + $0x18] sm:$0xff]
    %v226 = vld [vmem:[#allocation7 + $0x20] sm:$0xff]
    %v227 = vld [vmem:[#allocation7 + $0x28] sm:$0xff]
    %v228 = vld [vmem:[#allocation7 + $0x30] sm:$0xff]
    %v229 = vld [vmem:[#allocation7 + $0x38] sm:$0xff]
    %v230 = vld [vmem:[#allocation7 + $0x40] sm:$0xff]
    %v231 = vld [vmem:[#allocation7 + $0x48] sm:$0xff]
    %v232 = vld [vmem:[#allocation7 + $0x50] sm:$0xff]
    %v233 = vld [vmem:[#allocation7 + $0x58] sm:$0xff]
    %v234 = vld [vmem:[#allocation7 + $0x60] sm:$0xff]
    %v235 = vld [vmem:[#allocation7 + $0x68] sm:$0xff]
    %v236 = vld [vmem:[#allocation7 + $0x70] sm:$0xff]
    %v237 = vld [vmem:[#allocation7 + $0x78] sm:$0xff]
    %v238 = vld [vmem:[#allocation7 + $0x80] sm:$0xff]
    %v239 = vld [vmem:[#allocation7 + $0x88] sm:$0xff]
    %v240 = vld [vmem:[#allocation7 + $0x90] sm:$0xff]
    %v241 = vld [vmem:[#allocation7 + $0x98] sm:$0xff]
    %v242 = vld [vmem:[#allocation7 + $0xa0] sm:$0xff]
    %v243 = vld [vmem:[#allocation7 + $0xa8] sm:$0xff]
    %v244 = vld [vmem:[#allocation7 + $0xb0] sm:$0xff]
    %v245 = vld [vmem:[#allocation7 + $0xb8] sm:$0xff]
    %v246 = vld [vmem:[#allocation7 + $0xc0] sm:$0xff]
    %v247 = vld [vmem:[#allocation7 + $0xc8] sm:$0xff]
    %v248 = vld [vmem:[#allocation7 + $0xd0] sm:$0xff]
    %v249 = vld [vmem:[#allocation7 + $0xd8] sm:$0xff]
    %v250 = vld [vmem:[#allocation7 + $0xe0] sm:$0xff]
    %v251 = vld [vmem:[#allocation7 + $0xe8] sm:$0xff]
    %v252 = vld [vmem:[#allocation7 + $0xf0] sm:$0xff]
    %v253 = vld [vmem:[#allocation7 + $0xf8] sm:$0xff]
    %v254 = vld [vmem:[#allocation7 + $0x100] sm:$0xff]
    %v255 = vld [vmem:[#allocation7 + $0x108] sm:$0xff]
    %v256 = vld [vmem:[#allocation7 + $0x110] sm:$0xff]
    %v257 = vld [vmem:[#allocation7 + $0x118] sm:$0xff]
    %v258 = vld [vmem:[#allocation7 + $0x120] sm:$0xff]
    %v259 = vld [vmem:[#allocation7 + $0x128] sm:$0xff]
    %v260 = vld [vmem:[#allocation7 + $0x130] sm:$0xff]
    %v261 = vld [vmem:[#allocation7 + $0x138] sm:$0xff]
    %v262 = vld [vmem:[#allocation7 + $0x140] sm:$0xff]
    %v263 = vld [vmem:[#allocation7 + $0x148] sm:$0xff]
    %v264 = vld [vmem:[#allocation7 + $0x150] sm:$0xff]
    %v265 = vld [vmem:[#allocation7 + $0x158] sm:$0xff]
    %v266 = vld [vmem:[#allocation7 + $0x160] sm:$0xff]
    %v267 = vld [vmem:[#allocation7 + $0x168] sm:$0xff]
    %v268 = vld [vmem:[#allocation7 + $0x170] sm:$0xff]
    %v269 = vld [vmem:[#allocation7 + $0x178] sm:$0xff]
    %v270 = vld [vmem:[#allocation7 + $0x180] sm:$0xff]
    %v271 = vld [vmem:[#allocation7 + $0x188] sm:$0xff]
    %v272 = vld [vmem:[#allocation7 + $0x190] sm:$0xff]
    %v273 = vld [vmem:[#allocation7 + $0x198] sm:$0xff]
    %v274 = vld [vmem:[#allocation7 + $0x1a0] sm:$0xff]
    %v275 = vld [vmem:[#allocation7 + $0x1a8] sm:$0xff]
    %v276 = vld [vmem:[#allocation7 + $0x1b0] sm:$0xff]
    %v277 = vld [vmem:[#allocation7 + $0x1b8] sm:$0xff]
    %v278 = vld [vmem:[#allocation7 + $0x1c0] sm:$0xff]
    %v279 = vld [vmem:[#allocation7 + $0x1c8] sm:$0xff]
    %v280 = vld [vmem:[#allocation7 + $0x1d0] sm:$0xff]
    %v281 = vld [vmem:[#allocation7 + $0x1d8] sm:$0xff]
    %v282 = vld [vmem:[#allocation7 + $0x1e0] sm:$0xff]
    %v283 = vld [vmem:[#allocation7 + $0x1e8] sm:$0xff]
    %v284 = vld [vmem:[#allocation7 + $0x1f0] sm:$0xff]
    %v285 = vld [vmem:[#allocation7 + $0x1f8] sm:$0xff]
    %v286 = vld [vmem:[%s4] sm:$0xf]
    %v288 = vlaneseq
    %v289 = vshrl.u32 %v288, 7
    %v290 = vsub.s32 0, %v289
    %v291 = vrot.slane %v286, %v290
    %v292 = vlaneseq
    %v293 = vshrl.u32 %v292, 7
    %v294 = vsub.s32 1, %v293
    %v295 = vrot.slane %v286, %v294
    %v296 = vlaneseq
    %v297 = vshrl.u32 %v296, 7
    %v298 = vsub.s32 2, %v297
    %v299 = vrot.slane %v286, %v298
    %v300 = vlaneseq
    %v301 = vshrl.u32 %v300, 7
    %v302 = vsub.s32 3, %v301
    %v303 = vrot.slane %v286, %v302
    %v372 = vunpack.c.l.b16 %v222
    %v373 = vunpack.c.h.b16 %v222
    %v374 = vunpack.c.l.b16 %v223
    %v375 = vunpack.c.h.b16 %v223
    %v376 = vunpack.c.l.b16 %v224
    %v377 = vunpack.c.h.b16 %v224
    %v378 = vunpack.c.l.b16 %v225
    %v379 = vunpack.c.h.b16 %v225
    %v380 = vunpack.c.l.b16 %v226
    %v381 = vunpack.c.h.b16 %v226
    %v382 = vunpack.c.l.b16 %v227
    %v383 = vunpack.c.h.b16 %v227
    %v384 = vunpack.c.l.b16 %v228
    %v385 = vunpack.c.h.b16 %v228
    %v386 = vunpack.c.l.b16 %v229
    %v387 = vunpack.c.h.b16 %v229
    %v388 = vunpack.c.l.b16 %v230
    %v389 = vunpack.c.h.b16 %v230
    %v390 = vunpack.c.l.b16 %v231
    %v391 = vunpack.c.h.b16 %v231
    %v392 = vunpack.c.l.b16 %v232
    %v393 = vunpack.c.h.b16 %v232
    %v394 = vunpack.c.l.b16 %v233
    %v395 = vunpack.c.h.b16 %v233
    %v396 = vunpack.c.l.b16 %v234
    %v397 = vunpack.c.h.b16 %v234
    %v398 = vunpack.c.l.b16 %v235
    %v399 = vunpack.c.h.b16 %v235
    %v400 = vunpack.c.l.b16 %v236
    %v401 = vunpack.c.h.b16 %v236
    %v402 = vunpack.c.l.b16 %v237
    %v403 = vunpack.c.h.b16 %v237
    %v404 = vunpack.c.l.b16 %v238
    %v405 = vunpack.c.h.b16 %v238
    %v406 = vunpack.c.l.b16 %v239
    %v407 = vunpack.c.h.b16 %v239
    %v408 = vunpack.c.l.b16 %v240
    %v409 = vunpack.c.h.b16 %v240
    %v410 = vunpack.c.l.b16 %v241
    %v411 = vunpack.c.h.b16 %v241
    %v412 = vunpack.c.l.b16 %v242
    %v413 = vunpack.c.h.b16 %v242
    %v414 = vunpack.c.l.b16 %v243
    %v415 = vunpack.c.h.b16 %v243
    %v416 = vunpack.c.l.b16 %v244
    %v417 = vunpack.c.h.b16 %v244
    %v418 = vunpack.c.l.b16 %v245
    %v419 = vunpack.c.h.b16 %v245
    %v420 = vunpack.c.l.b16 %v246
    %v421 = vunpack.c.h.b16 %v246
    %v422 = vunpack.c.l.b16 %v247
    %v423 = vunpack.c.h.b16 %v247
    %v424 = vunpack.c.l.b16 %v248
    %v425 = vunpack.c.h.b16 %v248
    %v426 = vunpack.c.l.b16 %v249
    %v427 = vunpack.c.h.b16 %v249
    %v428 = vunpack.c.l.b16 %v250
    %v429 = vunpack.c.h.b16 %v250
    %v430 = vunpack.c.l.b16 %v251
    %v431 = vunpack.c.h.b16 %v251
    %v432 = vunpack.c.l.b16 %v252
    %v433 = vunpack.c.h.b16 %v252
    %v434 = vunpack.c.l.b16 %v253
    %v435 = vunpack.c.h.b16 %v253
    %v436 = vunpack.c.l.b16 %v254
    %v437 = vunpack.c.h.b16 %v254
    %v438 = vunpack.c.l.b16 %v255
    %v439 = vunpack.c.h.b16 %v255
    %v440 = vunpack.c.l.b16 %v256
    %v441 = vunpack.c.h.b16 %v256
    %v442 = vunpack.c.l.b16 %v257
    %v443 = vunpack.c.h.b16 %v257
    %v444 = vunpack.c.l.b16 %v258
    %v445 = vunpack.c.h.b16 %v258
    %v446 = vunpack.c.l.b16 %v259
    %v447 = vunpack.c.h.b16 %v259
    %v448 = vunpack.c.l.b16 %v260
    %v449 = vunpack.c.h.b16 %v260
    %v450 = vunpack.c.l.b16 %v261
    %v451 = vunpack.c.h.b16 %v261
    %v452 = vunpack.c.l.b16 %v262
    %v453 = vunpack.c.h.b16 %v262
    %v454 = vunpack.c.l.b16 %v263
    %v455 = vunpack.c.h.b16 %v263
    %v456 = vunpack.c.l.b16 %v264
    %v457 = vunpack.c.h.b16 %v264
    %v458 = vunpack.c.l.b16 %v265
    %v459 = vunpack.c.h.b16 %v265
    %v460 = vunpack.c.l.b16 %v266
    %v461 = vunpack.c.h.b16 %v266
    %v462 = vunpack.c.l.b16 %v267
    %v463 = vunpack.c.h.b16 %v267
    %v464 = vunpack.c.l.b16 %v268
    %v465 = vunpack.c.h.b16 %v268
    %v466 = vunpack.c.l.b16 %v269
    %v467 = vunpack.c.h.b16 %v269
    %v468 = vunpack.c.l.b16 %v270
    %v469 = vunpack.c.h.b16 %v270
    %v470 = vunpack.c.l.b16 %v271
    %v471 = vunpack.c.h.b16 %v271
    %v472 = vunpack.c.l.b16 %v272
    %v473 = vunpack.c.h.b16 %v272
    %v474 = vunpack.c.l.b16 %v273
    %v475 = vunpack.c.h.b16 %v273
    %v476 = vunpack.c.l.b16 %v274
    %v477 = vunpack.c.h.b16 %v274
    %v478 = vunpack.c.l.b16 %v275
    %v479 = vunpack.c.h.b16 %v275
    %v480 = vunpack.c.l.b16 %v276
    %v481 = vunpack.c.h.b16 %v276
    %v482 = vunpack.c.l.b16 %v277
    %v483 = vunpack.c.h.b16 %v277
    %v484 = vunpack.c.l.b16 %v278
    %v485 = vunpack.c.h.b16 %v278
    %v486 = vunpack.c.l.b16 %v279
    %v487 = vunpack.c.h.b16 %v279
    %v488 = vunpack.c.l.b16 %v280
    %v489 = vunpack.c.h.b16 %v280
    %v490 = vunpack.c.l.b16 %v281
    %v491 = vunpack.c.h.b16 %v281
    %v492 = vunpack.c.l.b16 %v282
    %v493 = vunpack.c.h.b16 %v282
    %v494 = vunpack.c.l.b16 %v283
    %v495 = vunpack.c.h.b16 %v283
    %v496 = vunpack.c.l.b16 %v284
    %v497 = vunpack.c.h.b16 %v284
    %v498 = vunpack.c.l.b16 %v285
    %v499 = vunpack.c.h.b16 %v285
    %v500 = vpack.c.b16 %v376, %v372
    %v501 = vpack.c.b16 %v377, %v373
    %v502 = vpack.c.b16 %v378, %v374
    %v503 = vpack.c.b16 %v379, %v375
    %v504 = vpack.c.b16 %v384, %v380
    %v505 = vpack.c.b16 %v385, %v381
    %v506 = vpack.c.b16 %v386, %v382
    %v507 = vpack.c.b16 %v387, %v383
    %v508 = vpack.c.b16 %v392, %v388
    %v509 = vpack.c.b16 %v393, %v389
    %v510 = vpack.c.b16 %v394, %v390
    %v511 = vpack.c.b16 %v395, %v391
    %v512 = vpack.c.b16 %v400, %v396
    %v513 = vpack.c.b16 %v401, %v397
    %v514 = vpack.c.b16 %v402, %v398
    %v515 = vpack.c.b16 %v403, %v399
    %v516 = vpack.c.b16 %v408, %v404
    %v517 = vpack.c.b16 %v409, %v405
    %v518 = vpack.c.b16 %v410, %v406
    %v519 = vpack.c.b16 %v411, %v407
    %v520 = vpack.c.b16 %v416, %v412
    %v521 = vpack.c.b16 %v417, %v413
    %v522 = vpack.c.b16 %v418, %v414
    %v523 = vpack.c.b16 %v419, %v415
    %v524 = vpack.c.b16 %v424, %v420
    %v525 = vpack.c.b16 %v425, %v421
    %v526 = vpack.c.b16 %v426, %v422
    %v527 = vpack.c.b16 %v427, %v423
    %v528 = vpack.c.b16 %v432, %v428
    %v529 = vpack.c.b16 %v433, %v429
    %v530 = vpack.c.b16 %v434, %v430
    %v531 = vpack.c.b16 %v435, %v431
    %v532 = vpack.c.b16 %v440, %v436
    %v533 = vpack.c.b16 %v441, %v437
    %v534 = vpack.c.b16 %v442, %v438
    %v535 = vpack.c.b16 %v443, %v439
    %v536 = vpack.c.b16 %v448, %v444
    %v537 = vpack.c.b16 %v449, %v445
    %v538 = vpack.c.b16 %v450, %v446
    %v539 = vpack.c.b16 %v451, %v447
    %v540 = vpack.c.b16 %v456, %v452
    %v541 = vpack.c.b16 %v457, %v453
    %v542 = vpack.c.b16 %v458, %v454
    %v543 = vpack.c.b16 %v459, %v455
    %v544 = vpack.c.b16 %v464, %v460
    %v545 = vpack.c.b16 %v465, %v461
    %v546 = vpack.c.b16 %v466, %v462
    %v547 = vpack.c.b16 %v467, %v463
    %v548 = vpack.c.b16 %v472, %v468
    %v549 = vpack.c.b16 %v473, %v469
    %v550 = vpack.c.b16 %v474, %v470
    %v551 = vpack.c.b16 %v475, %v471
    %v552 = vpack.c.b16 %v480, %v476
    %v553 = vpack.c.b16 %v481, %v477
    %v554 = vpack.c.b16 %v482, %v478
    %v555 = vpack.c.b16 %v483, %v479
    %v556 = vpack.c.b16 %v488, %v484
    %v557 = vpack.c.b16 %v489, %v485
    %v558 = vpack.c.b16 %v490, %v486
    %v559 = vpack.c.b16 %v491, %v487
    %v560 = vpack.c.b16 %v496, %v492
    %v561 = vpack.c.b16 %v497, %v493
    %v562 = vpack.c.b16 %v498, %v494
    %v563 = vpack.c.b16 %v499, %v495
    %628 = vmatprep.subr.bf16.mxu0 %v501
    %629 = vmatpush1.bf16.msra.mxu0 %v500
    %630 = vmatprep.subr.bf16.mxu0 %v505
    %631 = vmatpush1.bf16.msra.mxu0 %v504
    %632 = vmatprep.subr.bf16.mxu0 %v509
    %633 = vmatpush1.bf16.msra.mxu0 %v508
    %634 = vmatprep.subr.bf16.mxu0 %v513
    %635 = vmatpush1.bf16.msra.mxu0 %v512
    %636 = vmatprep.subr.bf16.mxu0 %v517
    %637 = vmatpush1.bf16.msra.mxu0 %v516
    %638 = vmatprep.subr.bf16.mxu0 %v521
    %639 = vmatpush1.bf16.msra.mxu0 %v520
    %640 = vmatprep.subr.bf16.mxu0 %v525
    %641 = vmatpush1.bf16.msra.mxu0 %v524
    %642 = vmatprep.subr.bf16.mxu0 %v529
    %643 = vmatpush1.bf16.msra.mxu0 %v528
    %644 = vmatprep.subr.bf16.mxu0 %v533
    %645 = vmatpush1.bf16.msra.mxu0 %v532
    %646 = vmatprep.subr.bf16.mxu0 %v537
    %647 = vmatpush1.bf16.msra.mxu0 %v536
    %648 = vmatprep.subr.bf16.mxu0 %v541
    %649 = vmatpush1.bf16.msra.mxu0 %v540
    %650 = vmatprep.subr.bf16.mxu0 %v545
    %651 = vmatpush1.bf16.msra.mxu0 %v544
    %652 = vmatprep.subr.bf16.mxu0 %v549
    %653 = vmatpush1.bf16.msra.mxu0 %v548
    %654 = vmatprep.subr.bf16.mxu0 %v553
    %655 = vmatpush1.bf16.msra.mxu0 %v552
    %656 = vmatprep.subr.bf16.mxu0 %v557
    %657 = vmatpush1.bf16.msra.mxu0 %v556
    %658 = vmatprep.subr.bf16.mxu0 %v561
    %659 = vmatpush1.bf16.msra.mxu0 %v560
    %660 = vmatprep.mubr.bf16.mxu0 %v221
    %661 = vmatmul.mubr.bf16.gmra.mrb[0].mxu0 %v220
    %v662 = vpop.f32.mrb[0].mxu0
    %v663 = vadd.f32 %v291, %v662
    %v664 = vpop.f32.mrb[0].mxu0
    %v665 = vadd.f32 %v295, %v664
    %v666 = vpop.f32.mrb[0].mxu0
    %v667 = vadd.f32 %v291, %v666
    %v668 = vpop.f32.mrb[0].mxu0
    %v669 = vadd.f32 %v295, %v668
    %670 = vdwg.mxu0
    %671 = vmatprep.subr.bf16.mxu0 %v503
    %672 = vmatpush1.bf16.msra.mxu0 %v502
    %673 = vmatprep.subr.bf16.mxu0 %v507
    %674 = vmatpush1.bf16.msra.mxu0 %v506
    %675 = vmatprep.subr.bf16.mxu0 %v511
    %676 = vmatpush1.bf16.msra.mxu0 %v510
    %677 = vmatprep.subr.bf16.mxu0 %v515
    %678 = vmatpush1.bf16.msra.mxu0 %v514
    %679 = vmatprep.subr.bf16.mxu0 %v519
    %680 = vmatpush1.bf16.msra.mxu0 %v518
    %681 = vmatprep.subr.bf16.mxu0 %v523
    %682 = vmatpush1.bf16.msra.mxu0 %v522
    %683 = vmatprep.subr.bf16.mxu0 %v527
    %684 = vmatpush1.bf16.msra.mxu0 %v526
    %685 = vmatprep.subr.bf16.mxu0 %v531
    %686 = vmatpush1.bf16.msra.mxu0 %v530
    %687 = vmatprep.subr.bf16.mxu0 %v535
    %688 = vmatpush1.bf16.msra.mxu0 %v534
    %689 = vmatprep.subr.bf16.mxu0 %v539
    %690 = vmatpush1.bf16.msra.mxu0 %v538
    %691 = vmatprep.subr.bf16.mxu0 %v543
    %692 = vmatpush1.bf16.msra.mxu0 %v542
    %693 = vmatprep.subr.bf16.mxu0 %v547
    %694 = vmatpush1.bf16.msra.mxu0 %v546
    %695 = vmatprep.subr.bf16.mxu0 %v551
    %696 = vmatpush1.bf16.msra.mxu0 %v550
    %697 = vmatprep.subr.bf16.mxu0 %v555
    %698 = vmatpush1.bf16.msra.mxu0 %v554
    %699 = vmatprep.subr.bf16.mxu0 %v559
    %700 = vmatpush1.bf16.msra.mxu0 %v558
    %701 = vmatprep.subr.bf16.mxu0 %v563
    %702 = vmatpush1.bf16.msra.mxu0 %v562
    %703 = vmatprep.mubr.bf16.mxu0 %v221
    %704 = vmatmul.mubr.bf16.gmra.mrb[0].mxu0 %v220
    %v705 = vpop.f32.mrb[0].mxu0
    %v706 = vadd.f32 %v299, %v705
    %v707 = vpop.f32.mrb[0].mxu0
    %v708 = vadd.f32 %v303, %v707
    %v709 = vpop.f32.mrb[0].mxu0
    %v710 = vadd.f32 %v299, %v709
    %v711 = vpop.f32.mrb[0].mxu0
    %v712 = vadd.f32 %v303, %v711
    %713 = vdwg.mxu0
    %v714 = vmax.f32 %v663, 0.0
    %v715 = vmax.f32 %v665, 0.0
    %v716 = vmax.f32 %v706, 0.0
    %v717 = vmax.f32 %v708, 0.0
    %v718 = vmax.f32 %v667, 0.0
    %v719 = vmax.f32 %v669, 0.0
    %v720 = vmax.f32 %v710, 0.0
    %v721 = vmax.f32 %v712, 0.0
    %v722 = vpack.c.bf16 %v718, %v714
    %v723 = vpack.c.bf16 %v719, %v715
    %v724 = vpack.c.bf16 %v720, %v716
    %v725 = vpack.c.bf16 %v721, %v717
    %v726 = vld [vmem:[#allocation8] sm:$0xff]
    %v727 = vld [vmem:[#allocation8 + $0x8] sm:$0xff]
    %v728 = vld [vmem:[#allocation8 + $0x10] sm:$0xff]
    %v729 = vld [vmem:[#allocation8 + $0x18] sm:$0xff]
    %v730 = vld [vmem:[#allocation8 + $0x20] sm:$0xff]
    %v731 = vld [vmem:[#allocation8 + $0x28] sm:$0xff]
    %v732 = vld [vmem:[#allocation8 + $0x30] sm:$0xff]
    %v733 = vld [vmem:[#allocation8 + $0x38] sm:$0xff]
    %v734 = vld [vmem:[#allocation8 + $0x40] sm:$0xff]
    %v735 = vld [vmem:[#allocation8 + $0x48] sm:$0xff]
    %v736 = vld [vmem:[#allocation8 + $0x50] sm:$0xff]
    %v737 = vld [vmem:[#allocation8 + $0x58] sm:$0xff]
    %v738 = vld [vmem:[#allocation8 + $0x60] sm:$0xff]
    %v739 = vld [vmem:[#allocation8 + $0x68] sm:$0xff]
    %v740 = vld [vmem:[#allocation8 + $0x70] sm:$0xff]
    %v741 = vld [vmem:[#allocation8 + $0x78] sm:$0xff]
    %v742 = vld [vmem:[#allocation8 + $0x80] sm:$0xff]
    %v743 = vld [vmem:[#allocation8 + $0x88] sm:$0xff]
    %v744 = vld [vmem:[#allocation8 + $0x90] sm:$0xff]
    %v745 = vld [vmem:[#allocation8 + $0x98] sm:$0xff]
    %v746 = vld [vmem:[#allocation8 + $0xa0] sm:$0xff]
    %v747 = vld [vmem:[#allocation8 + $0xa8] sm:$0xff]
    %v748 = vld [vmem:[#allocation8 + $0xb0] sm:$0xff]
    %v749 = vld [vmem:[#allocation8 + $0xb8] sm:$0xff]
    %v750 = vld [vmem:[#allocation8 + $0xc0] sm:$0xff]
    %v751 = vld [vmem:[#allocation8 + $0xc8] sm:$0xff]
    %v752 = vld [vmem:[#allocation8 + $0xd0] sm:$0xff]
    %v753 = vld [vmem:[#allocation8 + $0xd8] sm:$0xff]
    %v754 = vld [vmem:[#allocation8 + $0xe0] sm:$0xff]
    %v755 = vld [vmem:[#allocation8 + $0xe8] sm:$0xff]
    %v756 = vld [vmem:[#allocation8 + $0xf0] sm:$0xff]
    %v757 = vld [vmem:[#allocation8 + $0xf8] sm:$0xff]
    %v758 = vld [vmem:[#allocation8 + $0x100] sm:$0xff]
    %v759 = vld [vmem:[#allocation8 + $0x108] sm:$0xff]
    %v760 = vld [vmem:[#allocation8 + $0x110] sm:$0xff]
    %v761 = vld [vmem:[#allocation8 + $0x118] sm:$0xff]
    %v762 = vld [vmem:[#allocation8 + $0x120] sm:$0xff]
    %v763 = vld [vmem:[#allocation8 + $0x128] sm:$0xff]
    %v764 = vld [vmem:[#allocation8 + $0x130] sm:$0xff]
    %v765 = vld [vmem:[#allocation8 + $0x138] sm:$0xff]
    %v766 = vld [vmem:[#allocation8 + $0x140] sm:$0xff]
    %v767 = vld [vmem:[#allocation8 + $0x148] sm:$0xff]
    %v768 = vld [vmem:[#allocation8 + $0x150] sm:$0xff]
    %v769 = vld [vmem:[#allocation8 + $0x158] sm:$0xff]
    %v770 = vld [vmem:[#allocation8 + $0x160] sm:$0xff]
    %v771 = vld [vmem:[#allocation8 + $0x168] sm:$0xff]
    %v772 = vld [vmem:[#allocation8 + $0x170] sm:$0xff]
    %v773 = vld [vmem:[#allocation8 + $0x178] sm:$0xff]
    %v774 = vld [vmem:[#allocation8 + $0x180] sm:$0xff]
    %v775 = vld [vmem:[#allocation8 + $0x188] sm:$0xff]
    %v776 = vld [vmem:[#allocation8 + $0x190] sm:$0xff]
    %v777 = vld [vmem:[#allocation8 + $0x198] sm:$0xff]
    %v778 = vld [vmem:[#allocation8 + $0x1a0] sm:$0xff]
    %v779 = vld [vmem:[#allocation8 + $0x1a8] sm:$0xff]
    %v780 = vld [vmem:[#allocation8 + $0x1b0] sm:$0xff]
    %v781 = vld [vmem:[#allocation8 + $0x1b8] sm:$0xff]
    %v782 = vld [vmem:[#allocation8 + $0x1c0] sm:$0xff]
    %v783 = vld [vmem:[#allocation8 + $0x1c8] sm:$0xff]
    %v784 = vld [vmem:[#allocation8 + $0x1d0] sm:$0xff]
    %v785 = vld [vmem:[#allocation8 + $0x1d8] sm:$0xff]
    %v786 = vld [vmem:[#allocation8 + $0x1e0] sm:$0xff]
    %v787 = vld [vmem:[#allocation8 + $0x1e8] sm:$0xff]
    %v788 = vld [vmem:[#allocation8 + $0x1f0] sm:$0xff]
    %v789 = vld [vmem:[#allocation8 + $0x1f8] sm:$0xff]
    %v790 = vld [vmem:[%s6] sm:$0x3]
    %v792 = vlaneseq
    %v793 = vshrl.u32 %v792, 7
    %v794 = vsub.s32 0, %v793
    %v795 = vrot.slane %v790, %v794
    %v796 = vlaneseq
    %v797 = vshrl.u32 %v796, 7
    %v798 = vsub.s32 1, %v797
    %v799 = vrot.slane %v790, %v798
    %v866 = vunpack.c.l.b16 %v726
    %v867 = vunpack.c.h.b16 %v726
    %v868 = vunpack.c.l.b16 %v727
    %v869 = vunpack.c.h.b16 %v727
    %v870 = vunpack.c.l.b16 %v728
    %v871 = vunpack.c.h.b16 %v728
    %v872 = vunpack.c.l.b16 %v729
    %v873 = vunpack.c.h.b16 %v729
    %v874 = vunpack.c.l.b16 %v730
    %v875 = vunpack.c.h.b16 %v730
    %v876 = vunpack.c.l.b16 %v731
    %v877 = vunpack.c.h.b16 %v731
    %v878 = vunpack.c.l.b16 %v732
    %v879 = vunpack.c.h.b16 %v732
    %v880 = vunpack.c.l.b16 %v733
    %v881 = vunpack.c.h.b16 %v733
    %v882 = vunpack.c.l.b16 %v734
    %v883 = vunpack.c.h.b16 %v734
    %v884 = vunpack.c.l.b16 %v735
    %v885 = vunpack.c.h.b16 %v735
    %v886 = vunpack.c.l.b16 %v736
    %v887 = vunpack.c.h.b16 %v736
    %v888 = vunpack.c.l.b16 %v737
    %v889 = vunpack.c.h.b16 %v737
    %v890 = vunpack.c.l.b16 %v738
    %v891 = vunpack.c.h.b16 %v738
    %v892 = vunpack.c.l.b16 %v739
    %v893 = vunpack.c.h.b16 %v739
    %v894 = vunpack.c.l.b16 %v740
    %v895 = vunpack.c.h.b16 %v740
    %v896 = vunpack.c.l.b16 %v741
    %v897 = vunpack.c.h.b16 %v741
    %v898 = vunpack.c.l.b16 %v742
    %v899 = vunpack.c.h.b16 %v742
    %v900 = vunpack.c.l.b16 %v743
    %v901 = vunpack.c.h.b16 %v743
    %v902 = vunpack.c.l.b16 %v744
    %v903 = vunpack.c.h.b16 %v744
    %v904 = vunpack.c.l.b16 %v745
    %v905 = vunpack.c.h.b16 %v745
    %v906 = vunpack.c.l.b16 %v746
    %v907 = vunpack.c.h.b16 %v746
    %v908 = vunpack.c.l.b16 %v747
    %v909 = vunpack.c.h.b16 %v747
    %v910 = vunpack.c.l.b16 %v748
    %v911 = vunpack.c.h.b16 %v748
    %v912 = vunpack.c.l.b16 %v749
    %v913 = vunpack.c.h.b16 %v749
    %v914 = vunpack.c.l.b16 %v750
    %v915 = vunpack.c.h.b16 %v750
    %v916 = vunpack.c.l.b16 %v751
    %v917 = vunpack.c.h.b16 %v751
    %v918 = vunpack.c.l.b16 %v752
    %v919 = vunpack.c.h.b16 %v752
    %v920 = vunpack.c.l.b16 %v753
    %v921 = vunpack.c.h.b16 %v753
    %v922 = vunpack.c.l.b16 %v754
    %v923 = vunpack.c.h.b16 %v754
    %v924 = vunpack.c.l.b16 %v755
    %v925 = vunpack.c.h.b16 %v755
    %v926 = vunpack.c.l.b16 %v756
    %v927 = vunpack.c.h.b16 %v756
    %v928 = vunpack.c.l.b16 %v757
    %v929 = vunpack.c.h.b16 %v757
    %v930 = vunpack.c.l.b16 %v758
    %v931 = vunpack.c.h.b16 %v758
    %v932 = vunpack.c.l.b16 %v759
    %v933 = vunpack.c.h.b16 %v759
    %v934 = vunpack.c.l.b16 %v760
    %v935 = vunpack.c.h.b16 %v760
    %v936 = vunpack.c.l.b16 %v761
    %v937 = vunpack.c.h.b16 %v761
    %v938 = vunpack.c.l.b16 %v762
    %v939 = vunpack.c.h.b16 %v762
    %v940 = vunpack.c.l.b16 %v763
    %v941 = vunpack.c.h.b16 %v763
    %v942 = vunpack.c.l.b16 %v764
    %v943 = vunpack.c.h.b16 %v764
    %v944 = vunpack.c.l.b16 %v765
    %v945 = vunpack.c.h.b16 %v765
    %v946 = vunpack.c.l.b16 %v766
    %v947 = vunpack.c.h.b16 %v766
    %v948 = vunpack.c.l.b16 %v767
    %v949 = vunpack.c.h.b16 %v767
    %v950 = vunpack.c.l.b16 %v768
    %v951 = vunpack.c.h.b16 %v768
    %v952 = vunpack.c.l.b16 %v769
    %v953 = vunpack.c.h.b16 %v769
    %v954 = vunpack.c.l.b16 %v770
    %v955 = vunpack.c.h.b16 %v770
    %v956 = vunpack.c.l.b16 %v771
    %v957 = vunpack.c.h.b16 %v771
    %v958 = vunpack.c.l.b16 %v772
    %v959 = vunpack.c.h.b16 %v772
    %v960 = vunpack.c.l.b16 %v773
    %v961 = vunpack.c.h.b16 %v773
    %v962 = vunpack.c.l.b16 %v774
    %v963 = vunpack.c.h.b16 %v774
    %v964 = vunpack.c.l.b16 %v775
    %v965 = vunpack.c.h.b16 %v775
    %v966 = vunpack.c.l.b16 %v776
    %v967 = vunpack.c.h.b16 %v776
    %v968 = vunpack.c.l.b16 %v777
    %v969 = vunpack.c.h.b16 %v777
    %v970 = vunpack.c.l.b16 %v778
    %v971 = vunpack.c.h.b16 %v778
    %v972 = vunpack.c.l.b16 %v779
    %v973 = vunpack.c.h.b16 %v779
    %v974 = vunpack.c.l.b16 %v780
    %v975 = vunpack.c.h.b16 %v780
    %v976 = vunpack.c.l.b16 %v781
    %v977 = vunpack.c.h.b16 %v781
    %v978 = vunpack.c.l.b16 %v782
    %v979 = vunpack.c.h.b16 %v782
    %v980 = vunpack.c.l.b16 %v783
    %v981 = vunpack.c.h.b16 %v783
    %v982 = vunpack.c.l.b16 %v784
    %v983 = vunpack.c.h.b16 %v784
    %v984 = vunpack.c.l.b16 %v785
    %v985 = vunpack.c.h.b16 %v785
    %v986 = vunpack.c.l.b16 %v786
    %v987 = vunpack.c.h.b16 %v786
    %v988 = vunpack.c.l.b16 %v787
    %v989 = vunpack.c.h.b16 %v787
    %v990 = vunpack.c.l.b16 %v788
    %v991 = vunpack.c.h.b16 %v788
    %v992 = vunpack.c.l.b16 %v789
    %v993 = vunpack.c.h.b16 %v789
    %v994 = vpack.c.b16 %v868, %v866
    %v995 = vpack.c.b16 %v869, %v867
    %v996 = vpack.c.b16 %v872, %v870
    %v997 = vpack.c.b16 %v873, %v871
    %v998 = vpack.c.b16 %v876, %v874
    %v999 = vpack.c.b16 %v877, %v875
    %v1000 = vpack.c.b16 %v880, %v878
    %v1001 = vpack.c.b16 %v881, %v879
    %v1002 = vpack.c.b16 %v884, %v882
    %v1003 = vpack.c.b16 %v885, %v883
    %v1004 = vpack.c.b16 %v888, %v886
    %v1005 = vpack.c.b16 %v889, %v887
    %v1006 = vpack.c.b16 %v892, %v890
    %v1007 = vpack.c.b16 %v893, %v891
    %v1008 = vpack.c.b16 %v896, %v894
    %v1009 = vpack.c.b16 %v897, %v895
    %v1010 = vpack.c.b16 %v900, %v898
    %v1011 = vpack.c.b16 %v901, %v899
    %v1012 = vpack.c.b16 %v904, %v902
    %v1013 = vpack.c.b16 %v905, %v903
    %v1014 = vpack.c.b16 %v908, %v906
    %v1015 = vpack.c.b16 %v909, %v907
    %v1016 = vpack.c.b16 %v912, %v910
    %v1017 = vpack.c.b16 %v913, %v911
    %v1018 = vpack.c.b16 %v916, %v914
    %v1019 = vpack.c.b16 %v917, %v915
    %v1020 = vpack.c.b16 %v920, %v918
    %v1021 = vpack.c.b16 %v921, %v919
    %v1022 = vpack.c.b16 %v924, %v922
    %v1023 = vpack.c.b16 %v925, %v923
    %v1024 = vpack.c.b16 %v928, %v926
    %v1025 = vpack.c.b16 %v929, %v927
    %v1026 = vpack.c.b16 %v932, %v930
    %v1027 = vpack.c.b16 %v933, %v931
    %v1028 = vpack.c.b16 %v936, %v934
    %v1029 = vpack.c.b16 %v937, %v935
    %v1030 = vpack.c.b16 %v940, %v938
    %v1031 = vpack.c.b16 %v941, %v939
    %v1032 = vpack.c.b16 %v944, %v942
    %v1033 = vpack.c.b16 %v945, %v943
    %v1034 = vpack.c.b16 %v948, %v946
    %v1035 = vpack.c.b16 %v949, %v947
    %v1036 = vpack.c.b16 %v952, %v950
    %v1037 = vpack.c.b16 %v953, %v951
    %v1038 = vpack.c.b16 %v956, %v954
    %v1039 = vpack.c.b16 %v957, %v955
    %v1040 = vpack.c.b16 %v960, %v958
    %v1041 = vpack.c.b16 %v961, %v959
    %v1042 = vpack.c.b16 %v964, %v962
    %v1043 = vpack.c.b16 %v965, %v963
    %v1044 = vpack.c.b16 %v968, %v966
    %v1045 = vpack.c.b16 %v969, %v967
    %v1046 = vpack.c.b16 %v972, %v970
    %v1047 = vpack.c.b16 %v973, %v971
    %v1048 = vpack.c.b16 %v976, %v974
    %v1049 = vpack.c.b16 %v977, %v975
    %v1050 = vpack.c.b16 %v980, %v978
    %v1051 = vpack.c.b16 %v981, %v979
    %v1052 = vpack.c.b16 %v984, %v982
    %v1053 = vpack.c.b16 %v985, %v983
    %v1054 = vpack.c.b16 %v988, %v986
    %v1055 = vpack.c.b16 %v989, %v987
    %v1056 = vpack.c.b16 %v992, %v990
    %v1057 = vpack.c.b16 %v993, %v991
    %1122 = vmatprep.subr.bf16.mxu0 %v995
    %1123 = vmatpush1.bf16.msra.mxu0 %v994
    %1124 = vmatprep.subr.bf16.mxu0 %v997
    %1125 = vmatpush1.bf16.msra.mxu0 %v996
    %1126 = vmatprep.subr.bf16.mxu0 %v999
    %1127 = vmatpush1.bf16.msra.mxu0 %v998
    %1128 = vmatprep.subr.bf16.mxu0 %v1001
    %1129 = vmatpush1.bf16.msra.mxu0 %v1000
    %1130 = vmatprep.subr.bf16.mxu0 %v1003
    %1131 = vmatpush1.bf16.msra.mxu0 %v1002
    %1132 = vmatprep.subr.bf16.mxu0 %v1005
    %1133 = vmatpush1.bf16.msra.mxu0 %v1004
    %1134 = vmatprep.subr.bf16.mxu0 %v1007
    %1135 = vmatpush1.bf16.msra.mxu0 %v1006
    %1136 = vmatprep.subr.bf16.mxu0 %v1009
    %1137 = vmatpush1.bf16.msra.mxu0 %v1008
    %1138 = vmatprep.subr.bf16.mxu0 %v1011
    %1139 = vmatpush1.bf16.msra.mxu0 %v1010
    %1140 = vmatprep.subr.bf16.mxu0 %v1013
    %1141 = vmatpush1.bf16.msra.mxu0 %v1012
    %1142 = vmatprep.subr.bf16.mxu0 %v1015
    %1143 = vmatpush1.bf16.msra.mxu0 %v1014
    %1144 = vmatprep.subr.bf16.mxu0 %v1017
    %1145 = vmatpush1.bf16.msra.mxu0 %v1016
    %1146 = vmatprep.subr.bf16.mxu0 %v1019
    %1147 = vmatpush1.bf16.msra.mxu0 %v1018
    %1148 = vmatprep.subr.bf16.mxu0 %v1021
    %1149 = vmatpush1.bf16.msra.mxu0 %v1020
    %1150 = vmatprep.subr.bf16.mxu0 %v1023
    %1151 = vmatpush1.bf16.msra.mxu0 %v1022
    %1152 = vmatprep.subr.bf16.mxu0 %v1025
    %1153 = vmatpush1.bf16.msra.mxu0 %v1024
    %1154 = vmatprep.mubr.bf16.mxu0 %v723
    %1155 = vmatmul.mubr.bf16.gmra.mrb[0].mxu0 %v722
    %v1156 = vpop.f32.mrb[0].mxu0
    %v1157 = vadd.f32 %v795, %v1156
    %v1158 = vpop.f32.mrb[0].mxu0
    %v1159 = vadd.f32 %v799, %v1158
    %v1160 = vpop.f32.mrb[0].mxu0
    %v1161 = vadd.f32 %v795, %v1160
    %v1162 = vpop.f32.mrb[0].mxu0
    %v1163 = vadd.f32 %v799, %v1162
    %1164 = vdwg.mxu0
    %1165 = vmatprep.subr.bf16.mxu0 %v1027
    %1166 = vmatpush1.bf16.msra.mxu0 %v1026
    %1167 = vmatprep.subr.bf16.mxu0 %v1029
    %1168 = vmatpush1.bf16.msra.mxu0 %v1028
    %1169 = vmatprep.subr.bf16.mxu0 %v1031
    %1170 = vmatpush1.bf16.msra.mxu0 %v1030
    %1171 = vmatprep.subr.bf16.mxu0 %v1033
    %1172 = vmatpush1.bf16.msra.mxu0 %v1032
    %1173 = vmatprep.subr.bf16.mxu0 %v1035
    %1174 = vmatpush1.bf16.msra.mxu0 %v1034
    %1175 = vmatprep.subr.bf16.mxu0 %v1037
    %1176 = vmatpush1.bf16.msra.mxu0 %v1036
    %1177 = vmatprep.subr.bf16.mxu0 %v1039
    %1178 = vmatpush1.bf16.msra.mxu0 %v1038
    %1179 = vmatprep.subr.bf16.mxu0 %v1041
    %1180 = vmatpush1.bf16.msra.mxu0 %v1040
    %1181 = vmatprep.subr.bf16.mxu0 %v1043
    %1182 = vmatpush1.bf16.msra.mxu0 %v1042
    %1183 = vmatprep.subr.bf16.mxu0 %v1045
    %1184 = vmatpush1.bf16.msra.mxu0 %v1044
    %1185 = vmatprep.subr.bf16.mxu0 %v1047
    %1186 = vmatpush1.bf16.msra.mxu0 %v1046
    %1187 = vmatprep.subr.bf16.mxu0 %v1049
    %1188 = vmatpush1.bf16.msra.mxu0 %v1048
    %1189 = vmatprep.subr.bf16.mxu0 %v1051
    %1190 = vmatpush1.bf16.msra.mxu0 %v1050
    %1191 = vmatprep.subr.bf16.mxu0 %v1053
    %1192 = vmatpush1.bf16.msra.mxu0 %v1052
    %1193 = vmatprep.subr.bf16.mxu0 %v1055
    %1194 = vmatpush1.bf16.msra.mxu0 %v1054
    %1195 = vmatprep.subr.bf16.mxu0 %v1057
    %1196 = vmatpush1.bf16.msra.mxu0 %v1056
    %1197 = vmatprep.mubr.bf16.mxu0 %v725
    %1198 = vmatmul.mubr.bf16.gmra.mrb[0].mxu0 %v724
    %v1199 = vpop.f32.mrb[0].mxu0
    %v1200 = vadd.f32 %v1157, %v1199
    %v1201 = vpop.f32.mrb[0].mxu0
    %v1202 = vadd.f32 %v1159, %v1201
    %v1203 = vpop.f32.mrb[0].mxu0
    %v1204 = vadd.f32 %v1161, %v1203
    %v1205 = vpop.f32.mrb[0].mxu0
    %v1206 = vadd.f32 %v1163, %v1205
    %1207 = vdwg.mxu0
    %v1208 = vmax.f32 %v1200, 0.0
    %v1209 = vmax.f32 %v1202, 0.0
    %v1210 = vmax.f32 %v1204, 0.0
    %v1211 = vmax.f32 %v1206, 0.0
    %v1212 = vpack.c.bf16 %v1210, %v1208
    %v1213 = vpack.c.bf16 %v1211, %v1209
    %v1214 = vld [vmem:[#allocation10] sm:$0xf]
    %v1215 = vld [vmem:[#allocation10 + $0x4] sm:$0xf]
    %v1216 = vld [vmem:[#allocation10 + $0x8] sm:$0xf]
    %v1217 = vld [vmem:[#allocation10 + $0xc] sm:$0xf]
    %v1218 = vld [vmem:[#allocation10 + $0x10] sm:$0xf]
    %v1219 = vld [vmem:[#allocation10 + $0x14] sm:$0xf]
    %v1220 = vld [vmem:[#allocation10 + $0x18] sm:$0xf]
    %v1221 = vld [vmem:[#allocation10 + $0x1c] sm:$0xf]
    %v1222 = vld [vmem:[#allocation10 + $0x20] sm:$0xf]
    %v1223 = vld [vmem:[#allocation10 + $0x24] sm:$0xf]
    %v1224 = vld [vmem:[#allocation10 + $0x28] sm:$0xf]
    %v1225 = vld [vmem:[#allocation10 + $0x2c] sm:$0xf]
    %v1226 = vld [vmem:[#allocation10 + $0x30] sm:$0xf]
    %v1227 = vld [vmem:[#allocation10 + $0x34] sm:$0xf]
    %v1228 = vld [vmem:[#allocation10 + $0x38] sm:$0xf]
    %v1229 = vld [vmem:[#allocation10 + $0x3c] sm:$0xf]
    %v1230 = vld [vmem:[#allocation10 + $0x40] sm:$0xf]
    %v1231 = vld [vmem:[#allocation10 + $0x44] sm:$0xf]
    %v1232 = vld [vmem:[#allocation10 + $0x48] sm:$0xf]
    %v1233 = vld [vmem:[#allocation10 + $0x4c] sm:$0xf]
    %v1234 = vld [vmem:[#allocation10 + $0x50] sm:$0xf]
    %v1235 = vld [vmem:[#allocation10 + $0x54] sm:$0xf]
    %v1236 = vld [vmem:[#allocation10 + $0x58] sm:$0xf]
    %v1237 = vld [vmem:[#allocation10 + $0x5c] sm:$0xf]
    %v1238 = vld [vmem:[#allocation10 + $0x60] sm:$0xf]
    %v1239 = vld [vmem:[#allocation10 + $0x64] sm:$0xf]
    %v1240 = vld [vmem:[#allocation10 + $0x68] sm:$0xf]
    %v1241 = vld [vmem:[#allocation10 + $0x6c] sm:$0xf]
    %v1242 = vld [vmem:[#allocation10 + $0x70] sm:$0xf]
    %v1243 = vld [vmem:[#allocation10 + $0x74] sm:$0xf]
    %v1244 = vld [vmem:[#allocation10 + $0x78] sm:$0xf]
    %v1245 = vld [vmem:[#allocation10 + $0x7c] sm:$0xf]
    %v1246 = vld [vmem:[%s8] sm:$0x1]
    %v1248 = vlaneseq
    %v1249 = vshrl.u32 %v1248, 7
    %v1250 = vsub.s32 0, %v1249
    %v1251 = vrot.slane %v1246, %v1250
    %v1285 = vunpack.c.l.b16 %v1214
    %v1286 = vunpack.c.l.b16 %v1215
    %v1287 = vunpack.c.l.b16 %v1216
    %v1288 = vunpack.c.l.b16 %v1217
    %v1289 = vunpack.c.l.b16 %v1218
    %v1290 = vunpack.c.l.b16 %v1219
    %v1291 = vunpack.c.l.b16 %v1220
    %v1292 = vunpack.c.l.b16 %v1221
    %v1293 = vunpack.c.l.b16 %v1222
    %v1294 = vunpack.c.l.b16 %v1223
    %v1295 = vunpack.c.l.b16 %v1224
    %v1296 = vunpack.c.l.b16 %v1225
    %v1297 = vunpack.c.l.b16 %v1226
    %v1298 = vunpack.c.l.b16 %v1227
    %v1299 = vunpack.c.l.b16 %v1228
    %v1300 = vunpack.c.l.b16 %v1229
    %v1301 = vunpack.c.l.b16 %v1230
    %v1302 = vunpack.c.l.b16 %v1231
    %v1303 = vunpack.c.l.b16 %v1232
    %v1304 = vunpack.c.l.b16 %v1233
    %v1305 = vunpack.c.l.b16 %v1234
    %v1306 = vunpack.c.l.b16 %v1235
    %v1307 = vunpack.c.l.b16 %v1236
    %v1308 = vunpack.c.l.b16 %v1237
    %v1309 = vunpack.c.l.b16 %v1238
    %v1310 = vunpack.c.l.b16 %v1239
    %v1311 = vunpack.c.l.b16 %v1240
    %v1312 = vunpack.c.l.b16 %v1241
    %v1313 = vunpack.c.l.b16 %v1242
    %v1314 = vunpack.c.l.b16 %v1243
    %v1315 = vunpack.c.l.b16 %v1244
    %v1316 = vunpack.c.l.b16 %v1245
    %v1317 = vpack.c.b16 %v1286, %v1285
    %v1318 = vpack.c.b16 %v1288, %v1287
    %v1319 = vpack.c.b16 %v1290, %v1289
    %v1320 = vpack.c.b16 %v1292, %v1291
    %v1321 = vpack.c.b16 %v1294, %v1293
    %v1322 = vpack.c.b16 %v1296, %v1295
    %v1323 = vpack.c.b16 %v1298, %v1297
    %v1324 = vpack.c.b16 %v1300, %v1299
    %v1325 = vpack.c.b16 %v1302, %v1301
    %v1326 = vpack.c.b16 %v1304, %v1303
    %v1327 = vpack.c.b16 %v1306, %v1305
    %v1328 = vpack.c.b16 %v1308, %v1307
    %v1329 = vpack.c.b16 %v1310, %v1309
    %v1330 = vpack.c.b16 %v1312, %v1311
    %v1331 = vpack.c.b16 %v1314, %v1313
    %v1332 = vpack.c.b16 %v1316, %v1315
    %1349 = vmatprep.subr.bf16.mxu0 0
    %1350 = vmatpush1.bf16.msra.mxu0 %v1317
    %1351 = vmatprep.subr.bf16.mxu0 0
    %1352 = vmatpush1.bf16.msra.mxu0 %v1318
    %1353 = vmatprep.subr.bf16.mxu0 0
    %1354 = vmatpush1.bf16.msra.mxu0 %v1319
    %1355 = vmatprep.subr.bf16.mxu0 0
    %1356 = vmatpush1.bf16.msra.mxu0 %v1320
    %1357 = vmatprep.subr.bf16.mxu0 0
    %1358 = vmatpush1.bf16.msra.mxu0 %v1321
    %1359 = vmatprep.subr.bf16.mxu0 0
    %1360 = vmatpush1.bf16.msra.mxu0 %v1322
    %1361 = vmatprep.subr.bf16.mxu0 0
    %1362 = vmatpush1.bf16.msra.mxu0 %v1323
    %1363 = vmatprep.subr.bf16.mxu0 0
    %1364 = vmatpush1.bf16.msra.mxu0 %v1324
    %1365 = vmatprep.subr.bf16.mxu0 0
    %1366 = vmatpush1.bf16.msra.mxu0 %v1325
    %1367 = vmatprep.subr.bf16.mxu0 0
    %1368 = vmatpush1.bf16.msra.mxu0 %v1326
    %1369 = vmatprep.subr.bf16.mxu0 0
    %1370 = vmatpush1.bf16.msra.mxu0 %v1327
    %1371 = vmatprep.subr.bf16.mxu0 0
    %1372 = vmatpush1.bf16.msra.mxu0 %v1328
    %1373 = vmatprep.subr.bf16.mxu0 0
    %1374 = vmatpush1.bf16.msra.mxu0 %v1329
    %1375 = vmatprep.subr.bf16.mxu0 0
    %1376 = vmatpush1.bf16.msra.mxu0 %v1330
    %1377 = vmatprep.subr.bf16.mxu0 0
    %1378 = vmatpush1.bf16.msra.mxu0 %v1331
    %1379 = vmatprep.subr.bf16.mxu0 0
    %1380 = vmatpush1.bf16.msra.mxu0 %v1332
    %1381 = vmatprep.mubr.bf16.mxu0 %v1213
    %1382 = vmatmul.mubr.bf16.gmra.mrb[0].mxu0 %v1212
    %v1383 = vpop.f32.mrb[0].mxu0
    %v1384 = vadd.f32 %v1251, %v1383
    %v1385 = vpop.f32.mrb[0].mxu0
    %v1386 = vpop.f32.mrb[0].mxu0
    %v1387 = vadd.f32 %v1251, %v1386
    %v1388 = vpop.f32.mrb[0].mxu0
    %1389 = vdwg.mxu0
    %v1390 = vpack.c.bf16 %v1387, %v1384
    %v1392 = vunpack.c.l.b16 %v1390
    %v1393 = vunpack.c.h.b16 %v1390
    %v1394 = vpack.c.b16 %v1392, %v1392
    %v1395 = vpack.c.b16 %v1393, %v1393
    %1398 = vst [vmem:[#allocation11] sm:$0xf] %v1394
    %1399 = vst [vmem:[#allocation11 + $0x4] sm:$0xf] %v1395
    // Predicated region
    $region58: #{tpu_custom_call.1} parent=1 // pred_check
      _
    $region59: #{tpu_custom_call.1} parent=1 // pred_check_branch
      %1401 = sbr.rel (0) target = $region61
    $region60: #{tpu_custom_call.1} parent=1 // pred_region
      %s1403 = ssub.s32 128, 128
      %1404 = vsyncadd [#allocation4], %s1403
      %s1405 = sshll.u32 [#allocation11], 4
      %s1406 = int_to_ptr.vmem [resolvable:$true] %s1405
      %1411 = dma.vmem_to_hbm [thread:$0]  %s1406, 128, %s9, [#allocation4], 64, 64, 4
    $region61: #{tpu_custom_call.1} parent=1 // pred_fallthru
      _
    // Predicated region
    $region62: #{tpu_custom_call.1} parent=1 // pred_check
      _
    $region63: #{tpu_custom_call.1} parent=1 // pred_check_branch
      %1413 = sbr.rel (0) target = $region65
    $region64: #{tpu_custom_call.1} parent=1 // pred_region
      %1414 = dma.done [#allocation4], 128
    $region65: #{tpu_custom_call.1} parent=1 // pred_fallthru
      _
    %1415 = vsyncpa [#allocation3], 1
    %1416 = vsyncpa [#allocation6], 1
    %1417 = vsyncpa [#allocation9], 1
    %1418 = vsyncpa [#allocation4], 1

</llo_original>
